<compile_context>
chip_gen: v7x
topology: tpu7x:2x2x1
jax: 0.10.0
libtpu: 0.0.40
codegen_flags: <defaults>
</compile_context>

<pallas_src>
import jax
import jax.numpy as jnp
from jax.experimental import pallas as pl
from jax.experimental.pallas import tpu as pltpu


def _round_up(x, m):
    return (x + m - 1) // m * m


def _actor_mean_kernel(x_ref, w_ref, b_ref, mean_ref):
    # One batch tile: mean = x @ W + b.  MXU matmul with f32 accumulate, bias
    # folded onto the MXU result before the single store (no temporaries).
    mean_ref[...] = (
        jnp.dot(x_ref[...], w_ref[...], preferred_element_type=jnp.float32)
        + b_ref[...]
    ).astype(mean_ref.dtype)


def actor_forward(actor_hidden, w, b, logstd, *, block_m=256):
    """Pallas implementation of Actor.forward (DiagGaussian head).

    actor_hidden: (B, H) float32
    w:            (H, A) float32   (transposed PyTorch Linear weight)
    b:            (1, A) float32
    logstd:       (1, A) float32
    returns (mean, std): mean is (B, A); std is (1, A) and broadcasts lazily
    against mean (it has no batch dependence, so no (B, A) writeback).
    """
    B, H = actor_hidden.shape
    A = w.shape[1]

    # Batch tile selection (no padding copies; ragged last tile handled by
    # Pallas: OOB output rows are clipped, rows are independent).
    tm = min(block_m, _round_up(B, 8))
    if tm >= B:
        if B >= 16:
            # Whole batch would be a single grid step: split in two so that
            # v7x's two TensorCores both get work under ("parallel",).
            tm = _round_up(pl.cdiv(B, 2), 8)
        else:
            tm = B  # tiny batch: block == full array dims (no (8,) constraint)
    grid_m = pl.cdiv(B, tm)

    cost = pl.CostEstimate(
        flops=2 * B * H * A,
        transcendentals=0,
        bytes_accessed=4 * (B * H + H * A + A + B * A),
    )

    mean = pl.pallas_call(
        _actor_mean_kernel,
        grid=(grid_m,),
        in_specs=[
            pl.BlockSpec((tm, H), lambda i: (i, 0)),   # streamed batch tile
            pl.BlockSpec((H, A), lambda i: (0, 0)),    # resident weight
            pl.BlockSpec((1, A), lambda i: (0, 0)),    # resident bias
        ],
        out_specs=pl.BlockSpec((tm, A), lambda i: (i, 0)),
        out_shape=jax.ShapeDtypeStruct((B, A), jnp.float32),
        compiler_params=pltpu.CompilerParams(
            dimension_semantics=("parallel",),
        ),
        cost_estimate=cost,
    )(actor_hidden, w, b)

    # std has no batch dependence: keep it (1, A) and let the consumer
    # broadcast lazily (avoids materializing a (B, A) HBM array).
    std = jnp.exp(logstd)

    # TODO(synk): at the module's real shapes (B=2, H=32, A=4) this head should
    # be fused into the epilogue of the upstream actor_base MLP kernel; a
    # standalone pallas_call is launch-overhead-bound for a ~1 KFLOP matmul.
    return mean, std


def prepare_actor_params(w_pt, b_pt, logstd_pt):
    """One-time parameter prep (done at init, NOT per forward call):
    PyTorch Linear weight (A, H) -> kernel layout (H, A); bias/logstd -> (1, A).
    """
    w = jnp.asarray(w_pt, jnp.float32).T
    b = jnp.asarray(b_pt, jnp.float32).reshape(1, -1)
    logstd = jnp.asarray(logstd_pt, jnp.float32).reshape(1, -1)
    return w, b, logstd


def _orthogonal(key, out_dim, in_dim, gain=1.0):
    """Deterministic orthogonal init matching nn.init.orthogonal_ semantics."""
    a = jax.random.normal(key, (max(out_dim, in_dim), min(out_dim, in_dim)),
                          dtype=jnp.float32)
    q, r = jnp.linalg.qr(a)
    d = jnp.diagonal(r)
    q = q * jnp.where(d == 0, 1.0, jnp.sign(d))   # sign fix, zero-diag safe
    if out_dim < in_dim:
        q = q.T
    return gain * q[:out_dim, :in_dim]            # (out_dim, in_dim) like PyTorch


if __name__ == "__main__":
    # Small shapes consistent with the module: hidden_size=32, acs_dim=4, batch=2.
    batch, hidden_size, acs_dim = 2, 32, 4

    key = jax.random.PRNGKey(0)
    k_x, k_w, k_x2 = jax.random.split(key, 3)

    # Parameters of actor_dist (DiagGaussian): fc_mean (orthogonal, bias=0), logstd=0.
    w_pt = _orthogonal(k_w, acs_dim, hidden_size, gain=1.0)   # PyTorch layout (A, H)
    b_pt = jnp.zeros((acs_dim,), dtype=jnp.float32)
    logstd_pt = jnp.zeros((acs_dim,), dtype=jnp.float32)
    w, b, logstd = prepare_actor_params(w_pt, b_pt, logstd_pt)  # once, at init

    # Input: actor_hidden of size hidden_size (output of the MLP base upstream).
    actor_hidden = jax.random.normal(k_x, (batch, hidden_size), dtype=jnp.float32)

    mean, std = actor_forward(actor_hidden, w, b, logstd)
    jax.block_until_ready((mean, std))

    # Reference check in plain JAX.
    mean_ref = actor_hidden @ w + b
    std_ref = jnp.exp(logstd)
    assert mean.shape == (batch, acs_dim) and std.shape == (1, acs_dim)
    assert jnp.allclose(mean, mean_ref, atol=1e-5), "mean mismatch"
    assert jnp.allclose(std, std_ref, atol=1e-6), "std mismatch"
    # std broadcasts against mean exactly as torch.distributions.Normal would.
    assert jnp.broadcast_shapes(mean.shape, std.shape) == (batch, acs_dim)

    # Second check: larger ragged batch exercises the multi-step grid path
    # (>= 2 grid steps for v7x megacore, last tile not a multiple of 8).
    B2, H2 = 37, hidden_size
    x2 = jax.random.normal(k_x2, (B2, H2), dtype=jnp.float32)
    mean2, std2 = actor_forward(x2, w, b, logstd)
    jax.block_until_ready((mean2, std2))
    assert jnp.allclose(mean2, x2 @ w + b, atol=1e-5), "ragged-grid mean mismatch"

    # TODO(synk): the torch.distributions.Normal wrapper (sampling / log_prob /
    # entropy) has no Pallas equivalent; the distribution parameters (mean, std)
    # are returned instead.
    print("KERNEL_OK")
</pallas_src>

<mosaic_0001>
module attributes {stable_mosaic.version = 11 : i64} {
  func.func @_actor_mean_kernel(%arg0: i32, %arg1: memref<2x32xf32, #tpu.memory_space<vmem>>, %arg2: memref<32x4xf32, #tpu.memory_space<vmem>>, %arg3: memref<1x4xf32, #tpu.memory_space<vmem>>, %arg4: memref<2x4xf32, #tpu.memory_space<vmem>>) attributes {dimension_semantics = [#tpu.dimension_semantics<parallel>], iteration_bounds = array<i64: 1>, scalar_prefetch = 0 : i64, scratch_operands = 0 : i64, tpu.core_type = #tpu.core_type<tc>, window_params = [{transform_indices = @transform_0, window_bounds = array<i64: 2, 32>}, {pipeline_mode = #tpu.pipeline_mode<synchronous>, transform_indices = @transform_1, window_bounds = array<i64: 32, 4>}, {pipeline_mode = #tpu.pipeline_mode<synchronous>, transform_indices = @transform_2, window_bounds = array<i64: 1, 4>}, {transform_indices = @transform_3, window_bounds = array<i64: 2, 4>}]} {
    %c0 = arith.constant 0 : index
    %c0_0 = arith.constant 0 : index
    %0 = vector.load %arg1[%c0, %c0_0] : memref<2x32xf32, #tpu.memory_space<vmem>>, vector<2x32xf32>
    %c0_1 = arith.constant 0 : index
    %c0_2 = arith.constant 0 : index
    %1 = vector.load %arg2[%c0_1, %c0_2] : memref<32x4xf32, #tpu.memory_space<vmem>>, vector<32x4xf32>
    %cst = arith.constant dense<0.000000e+00> : vector<2x4xf32>
    %2 = tpu.matmul %0, %1, %cst {dimension_numbers = #tpu.dot_dimension_numbers<[1], [0], [0], [1], [0, 0, 1, 1], [], []>} : vector<2x32xf32>, vector<32x4xf32>, vector<2x4xf32> -> vector<2x4xf32>
    %c0_3 = arith.constant 0 : index
    %c0_4 = arith.constant 0 : index
    %3 = vector.load %arg3[%c0_3, %c0_4] : memref<1x4xf32, #tpu.memory_space<vmem>>, vector<1x4xf32>
    %4 = vector.broadcast %3 : vector<1x4xf32> to vector<2x4xf32>
    %5 = arith.addf %2, %4 : vector<2x4xf32>
    %c0_5 = arith.constant 0 : index
    %c0_6 = arith.constant 0 : index
    %6 = vector.load %arg4[%c0_5, %c0_6] : memref<2x4xf32, #tpu.memory_space<vmem>>, vector<2x4xf32>
    tpu.vector_store %arg4[%c0_5, %c0_6], %5 {strides = array<i32>} : memref<2x4xf32, #tpu.memory_space<vmem>>, vector<2x4xf32>,
    return
  }
  func.func @transform_0(%arg0: i32) -> (i32, i32) {
    %c0_i32 = arith.constant 0 : i32
    %c0_i32_0 = arith.constant 0 : i32
    return %arg0, %c0_i32 : i32, i32
  }
  func.func @transform_1(%arg0: i32) -> (i32, i32) {
    %c0_i32 = arith.constant 0 : i32
    %c0_i32_0 = arith.constant 0 : i32
    %c0_i32_1 = arith.constant 0 : i32
    return %c0_i32, %c0_i32_0 : i32, i32
  }
  func.func @transform_2(%arg0: i32) -> (i32, i32) {
    %c0_i32 = arith.constant 0 : i32
    %c0_i32_0 = arith.constant 0 : i32
    %c0_i32_1 = arith.constant 0 : i32
    return %c0_i32, %c0_i32_0 : i32, i32
  }
  func.func @transform_3(%arg0: i32) -> (i32, i32) {
    %c0_i32 = arith.constant 0 : i32
    %c0_i32_0 = arith.constant 0 : i32
    return %arg0, %c0_i32 : i32, i32
  }
}

</mosaic_0001>

<llo_original>
// kernel: tpu_custom_call.1
$region0: #{tpu_custom_call.1}
  #allocation0 [shape = 'u32[]', space=smem, size = 0x4, offset = 0x4, fixed_abs, tag = 'smem constant byte address 0x4 - core index']
  #allocation1 [shape = 'u32[144,128]{1,0:T(1,128)}', space=vmem, size = 0x12000, scoped, tag = 'internal scratch']
  %s0 = inlined_call_operand.vmem [shape: f32[2,32], index: 0, kind: input, shape index: {}]
  %s1 = inlined_call_operand.vmem [shape: f32[32,4], index: 1, kind: input, shape index: {}]
  %s2 = inlined_call_operand.vmem [shape: f32[1,4], index: 2, kind: input, shape index: {}]
  %s3 = inlined_call_operand.hbm [shape: f32[2,4], index: 3, kind: output, shape index: {}]
  %s4 = sld [smem:[#allocation0]]
  $region22: #{tpu_custom_call.1} parent=0
    _
  %s6 = ssub.s32 1, %s4
  %s7 = scalar_select 0, %s6, %s4
  $region1: #{tpu_custom_call.1} parent=0
    #allocation2 [shape = 'u8[1024]{0}', space=vmem, size = 0x400, scoped, tag = 'output window, operand 0, single buffered']
    #allocation3 [shape = 's32[1]{0}', space=sflag, size = 0x4, scoped, tag = 'scoped memory for tpu_custom_call.1']
    %8 = vsyncpa [#allocation3], 0
    // Predicated region
    $region2: #{tpu_custom_call.1} parent=1 // pred_check
      _
    $region3: #{tpu_custom_call.1} parent=1 // pred_check_branch
      %10 = sbr.rel (0) target = $region5
    $region4: #{tpu_custom_call.1} parent=1 // pred_region
      _
    $region5: #{tpu_custom_call.1} parent=1 // pred_fallthru
      _
    // Predicated region
    $region6: #{tpu_custom_call.1} parent=1 // pred_check
      _
    $region7: #{tpu_custom_call.1} parent=1 // pred_check_branch
      %12 = sbr.rel (0) target = $region9
    $region8: #{tpu_custom_call.1} parent=1 // pred_region
      _
    $region9: #{tpu_custom_call.1} parent=1 // pred_fallthru
      _
    // Predicated region
    $region10: #{tpu_custom_call.1} parent=1 // pred_check
      _
    $region11: #{tpu_custom_call.1} parent=1 // pred_check_branch
      %14 = sbr.rel (0) target = $region13
    $region12: #{tpu_custom_call.1} parent=1 // pred_region
      _
    $region13: #{tpu_custom_call.1} parent=1 // pred_fallthru
      _
    %v15 = vld [vmem:[%s0] sm:$0x3]
    %v16 = vld [vmem:[%s1] sm:$0xff]
    %v17 = vld [vmem:[%s1 + $0x8] sm:$0xff]
    %v18 = vld [vmem:[%s1 + $0x10] sm:$0xff]
    %v19 = vld [vmem:[%s1 + $0x18] sm:$0xff]
    %v20 = vld [vmem:[%s2] sm:$0x1]
    %v22 = vlaneseq
    %v23 = vshrl.u32 %v22, 7
    %v24 = vsub.s32 0, %v23
    %v25 = vrot.slane %v20, %v24
    %vm27 = vcmask 261120
    %v29 = vsel %vm27, %v15, 0
    %31 = vmatprep.subr.mxu0 0.0
    %32 = vmatpush1.msra.mxu0 %v16
    %33 = vmatprep.subr.mxu0 0.0
    %34 = vmatpush1.msra.mxu0 %v17
    %35 = vmatprep.subr.mxu0 0.0
    %36 = vmatpush1.msra.mxu0 %v18
    %37 = vmatprep.subr.mxu0 0.0
    %38 = vmatpush1.msra.mxu0 %v19
    %39 = vmatprep.subr.mxu0 0.0
    %40 = vmatpush1.msra.mxu0 0.0
    %41 = vmatprep.subr.mxu0 0.0
    %42 = vmatpush1.msra.mxu0 0.0
    %43 = vmatprep.subr.mxu0 0.0
    %44 = vmatpush1.msra.mxu0 0.0
    %45 = vmatprep.subr.mxu0 0.0
    %46 = vmatpush1.msra.mxu0 0.0
    %47 = vmatprep.subr.mxu0 0.0
    %48 = vmatpush1.msra.mxu0 0.0
    %49 = vmatprep.subr.mxu0 0.0
    %50 = vmatpush1.msra.mxu0 0.0
    %51 = vmatprep.subr.mxu0 0.0
    %52 = vmatpush1.msra.mxu0 0.0
    %53 = vmatprep.subr.mxu0 0.0
    %54 = vmatpush1.msra.mxu0 0.0
    %55 = vmatprep.subr.mxu0 0.0
    %56 = vmatpush1.msra.mxu0 0.0
    %57 = vmatprep.subr.mxu0 0.0
    %58 = vmatpush1.msra.mxu0 0.0
    %59 = vmatprep.subr.mxu0 0.0
    %60 = vmatpush1.msra.mxu0 0.0
    %61 = vmatprep.subr.mxu0 0.0
    %62 = vmatpush1.msra.mxu0 0.0
    %63 = vmatprep.subr.mxu0 0.0
    %64 = vmatpush1.msra.mxu0 0.0
    %65 = vmatprep.subr.mxu0 0.0
    %66 = vmatpush1.msra.mxu0 0.0
    %67 = vmatprep.subr.mxu0 0.0
    %68 = vmatpush1.msra.mxu0 0.0
    %69 = vmatprep.subr.mxu0 0.0
    %70 = vmatpush1.msra.mxu0 0.0
    %71 = vmatprep.subr.mxu0 0.0
    %72 = vmatpush1.msra.mxu0 0.0
    %73 = vmatprep.subr.mxu0 0.0
    %74 = vmatpush1.msra.mxu0 0.0
    %75 = vmatprep.subr.mxu0 0.0
    %76 = vmatpush1.msra.mxu0 0.0
    %77 = vmatprep.subr.mxu0 0.0
    %78 = vmatpush1.msra.mxu0 0.0
    %79 = vmatprep.subr.mxu0 0.0
    %80 = vmatpush1.msra.mxu0 0.0
    %81 = vmatprep.subr.mxu0 0.0
    %82 = vmatpush1.msra.mxu0 0.0
    %83 = vmatprep.subr.mxu0 0.0
    %84 = vmatpush1.msra.mxu0 0.0
    %85 = vmatprep.subr.mxu0 0.0
    %86 = vmatpush1.msra.mxu0 0.0
    %87 = vmatprep.subr.mxu0 0.0
    %88 = vmatpush1.msra.mxu0 0.0
    %89 = vmatprep.subr.mxu0 0.0
    %90 = vmatpush1.msra.mxu0 0.0
    %91 = vmatprep.subr.mxu0 0.0
    %92 = vmatpush1.msra.mxu0 0.0
    %93 = vmatprep.subr.mxu0 0.0
    %94 = vmatpush1.msra.mxu0 0.0
    %95 = vmatprep.mubr.f32.mxu0 0.0
    %96 = vmatmul.mubr.f32.gmra.mrb[0].mxu0 %v29
    %v97 = vpop.f32.mrb[0].mxu0
    %v98 = vadd.f32 %v25, %v97
    %v99 = vpop.f32.mrb[0].mxu0
    %100 = vdwg.mxu0
    %vm101 = vcmask 25600
    %102 = vst.msk [vmem:[#allocation2] sm:$0x3] %vm101, %v98
    // Predicated region
    $region14: #{tpu_custom_call.1} parent=1 // pred_check
      _
    $region15: #{tpu_custom_call.1} parent=1 // pred_check_branch
      %104 = sbr.rel (0) target = $region17
    $region16: #{tpu_custom_call.1} parent=1 // pred_region
      %s106 = ssub.s32 32, 32
      %107 = vsyncadd [#allocation3], %s106
      %s109 = sshll.u32 [#allocation2], 4
      %s110 = int_to_ptr.vmem [resolvable:$true] %s109
      %112 = dma.vmem_to_hbm [thread:$0]  %s110, 32, %s3, [#allocation3]
    $region17: #{tpu_custom_call.1} parent=1 // pred_fallthru
      _
    // Predicated region
    $region18: #{tpu_custom_call.1} parent=1 // pred_check
      _
    $region19: #{tpu_custom_call.1} parent=1 // pred_check_branch
      %114 = sbr.rel (0) target = $region21
    $region20: #{tpu_custom_call.1} parent=1 // pred_region
      %115 = dma.done [#allocation3], 32
    $region21: #{tpu_custom_call.1} parent=1 // pred_fallthru
      _
    %116 = vsyncpa [#allocation3], 1

</llo_original>
